<compile_context>
chip_gen: v5e
topology: v5e:2x2
jax: 0.10.0
libtpu: 0.0.40
codegen_flags: <defaults>
</compile_context>

<pallas_src>
import functools

import jax
import jax.numpy as jnp
from jax.experimental import pallas as pl
from jax.experimental.pallas import tpu as pltpu


def _round_up(a, b):
    return ((a + b - 1) // b) * b


def _masked_max_kernel(x_ref, m_ref, o_ref, *, seq_len, seq_tile):
    # x_ref : (BB, TS, TH)  hidden-state tile
    # m_ref : (BB, TS, 1)   0/1 validity mask tile (x.dtype)
    # o_ref : (BB, TH)      running max, resident across the sequence grid axis
    s = pl.program_id(2)
    x = x_ref[...]
    m = m_ref[...]
    neg = jnp.asarray(-10000.0, dtype=x.dtype)

    valid = m != 0                                               # (BB, TS, 1)
    if seq_len % seq_tile != 0:
        # Mask out-of-range rows of the (padded) last partial sequence tile.
        row = jax.lax.broadcasted_iota(jnp.int32, m.shape, 1)    # (BB, TS, 1)
        valid = jnp.logical_and(valid, s * seq_tile + row < seq_len)

    blk_max = jnp.max(jnp.where(valid, x, neg), axis=1)          # (BB, TH)

    @pl.when(s == 0)
    def _():
        o_ref[...] = blk_max

    @pl.when(s > 0)
    def _():
        o_ref[...] = jnp.maximum(o_ref[...], blk_max)


def _pick_tiles(B, S, H, dtype):
    """Choose (BB, n_b, TH, n_h, TS, n_s, vmem_limit) from the device VMEM."""
    itemsize = jnp.dtype(dtype).itemsize
    if itemsize >= 4:
        pack = 8            # f32 vreg tile (8, 128)
    elif itemsize == 2:
        pack = 16           # bf16/f16 packed tile (16, 128)
    else:
        pack = 32           # int8/fp8 packed tile (32, 128)

    try:
        vmem_bytes = int(pltpu.get_tpu_info().vmem_capacity_bytes)
    except Exception:
        vmem_bytes = 64 * 1024 * 1024   # conservative fallback (v7x per-TC VMEM)

    # Per-grid-step x-block target: large enough that the ~0.35us/step pipeline
    # overhead is negligible even at v7x HBM speeds, small enough that the
    # double-buffered blocks stay well inside the scoped-VMEM limit below.
    target = max(1 << 20, min(16 << 20, vmem_bytes // 8))

    bb = min(B, 8)
    n_b = pl.cdiv(B, bb)

    # Megacore-friendly hidden split (v7x has 2 TCs); neutral elsewhere since
    # TS below is sized against TH, keeping per-step bytes at `target`.
    th, n_h = H, 1
    while n_b * n_h < 4 and th % 256 == 0:
        th //= 2
        n_h *= 2

    # Sequence tile.  The (TH + 128) term charges the lane-padded (BB, TS, 1)
    # mask buffer against the same budget so it cannot blow VMEM when H is small.
    rows = target // max(1, bb * itemsize * (th + 128))
    if rows >= S:
        ts = S
    else:
        ts = max(pack, (int(rows) // pack) * pack)
        ts = min(ts, S)
    n_s = pl.cdiv(S, ts)

    # Scoped-VMEM accounting: double-buffered inputs (x + lane-padded mask),
    # output block, plus slack.  Cap at 3/4 of physical VMEM (48 MiB on v7x).
    x_blk = bb * ts * th * itemsize
    m_blk = bb * _round_up(ts, 32) * 128 * itemsize
    o_blk = _round_up(bb, 8) * _round_up(th, 128) * itemsize
    need = 2 * (x_blk + m_blk) + 2 * o_blk + (2 << 20)
    vmem_limit = int(min(max(need, 32 << 20), (vmem_bytes * 3) // 4))

    return bb, n_b, th, n_h, ts, n_s, vmem_limit


def max_pooling(last_hidden_state: jax.Array, attention_mask: jax.Array) -> jax.Array:
    """Pallas equivalent of MaxPooling.forward.

    Args:
      last_hidden_state: [B, S, H] float array.
      attention_mask:    [B, S] array (any numeric/bool dtype; 0 == padding).
    Returns:
      [B, H] array, same dtype as last_hidden_state.
    """
    B, S, H = last_hidden_state.shape
    dtype = last_hidden_state.dtype
    itemsize = jnp.dtype(dtype).itemsize

    bb, n_b, th, n_h, ts, n_s, vmem_limit = _pick_tiles(B, S, H, dtype)

    # 0/1 validity in x.dtype; [B, S, 1] broadcasts along the hidden/lane dim
    # inside the kernel without widening the select on bf16 inputs.
    mask3 = (attention_mask != 0).astype(dtype).reshape(B, S, 1)

    kernel = functools.partial(_masked_max_kernel, seq_len=S, seq_tile=ts)

    cost = pl.CostEstimate(
        flops=2 * B * S * H,
        transcendentals=0,
        bytes_accessed=(B * S * H * itemsize            # hidden states (read)
                        + B * S * itemsize * n_h        # mask (read, per h-split)
                        + B * H * itemsize),            # output (write)
    )

    return pl.pallas_call(
        kernel,
        out_shape=jax.ShapeDtypeStruct((B, H), dtype),
        grid_spec=pltpu.PrefetchScalarGridSpec(
            num_scalar_prefetch=0,
            grid=(n_b, n_h, n_s),
            in_specs=[
                pl.BlockSpec((bb, ts, th), lambda b, h, s: (b, s, h)),
                pl.BlockSpec((bb, ts, 1), lambda b, h, s: (b, s, 0)),
            ],
            out_specs=pl.BlockSpec((bb, th), lambda b, h, s: (b, h)),
        ),
        compiler_params=pltpu.CompilerParams(
            dimension_semantics=("parallel", "parallel", "arbitrary"),
            vmem_limit_bytes=vmem_limit,
        ),
        cost_estimate=cost,
    )(last_hidden_state, mask3)


def _reference(last_hidden_state, attention_mask):
    # Pure-JAX reference mirroring the PyTorch semantics.
    m = attention_mask.astype(jnp.float32)[..., None]
    emb = jnp.where(m == 0,
                    jnp.asarray(-10000.0, last_hidden_state.dtype),
                    last_hidden_state)
    return jnp.max(emb, axis=1)


if __name__ == "__main__":
    key = jax.random.PRNGKey(0)
    k1, k2 = jax.random.split(key)

    # Primary small-shape check (prefix-padding mask).
    B, S, H = 2, 8, 32
    last_hidden_state = jax.random.normal(k1, (B, S, H), dtype=jnp.float32)
    lengths = jnp.array([5, 8], dtype=jnp.int32)
    attention_mask = (jnp.arange(S)[None, :] < lengths[:, None]).astype(jnp.int32)

    out = jax.block_until_ready(max_pooling(last_hidden_state, attention_mask))
    ref = _reference(last_hidden_state, attention_mask)
    assert out.shape == (B, H), out.shape
    assert jnp.allclose(out, ref, atol=1e-6), "mismatch vs reference (prefix mask)"

    # Secondary check: odd shapes + arbitrary (non-prefix) mask, incl. one
    # fully-masked row (hits the -10000 sentinel path).
    B2, S2, H2 = 3, 9, 160
    x2 = jax.random.normal(k2, (B2, S2, H2), dtype=jnp.float32)
    m2 = (jax.random.uniform(jax.random.PRNGKey(1), (B2, S2)) > 0.4).astype(jnp.int32)
    m2 = m2.at[1, :].set(0)
    out2 = jax.block_until_ready(max_pooling(x2, m2))
    ref2 = _reference(x2, m2)
    assert out2.shape == (B2, H2), out2.shape
    assert jnp.allclose(out2, ref2, atol=1e-6), "mismatch vs reference (arbitrary mask)"

    print("KERNEL_OK")
</pallas_src>

<mosaic_0001>
module attributes {stable_mosaic.version = 11 : i64} {
  func.func @_masked_max_kernel(%arg0: i32, %arg1: i32, %arg2: i32, %arg3: memref<2x8x32xf32, #tpu.memory_space<vmem>>, %arg4: memref<2x8x1xf32, #tpu.memory_space<vmem>>, %arg5: memref<2x32xf32, #tpu.memory_space<vmem>>) attributes {dimension_semantics = [#tpu.dimension_semantics<parallel>, #tpu.dimension_semantics<parallel>, #tpu.dimension_semantics<arbitrary>], iteration_bounds = array<i64: 1, 1, 1>, scalar_prefetch = 0 : i64, scratch_operands = 0 : i64, tpu.core_type = #tpu.core_type<tc>, window_params = [{transform_indices = @transform_0, window_bounds = array<i64: 2, 8, 32>}, {transform_indices = @transform_1, window_bounds = array<i64: 2, 8, 1>}, {transform_indices = @transform_2, window_bounds = array<i64: 2, 32>}]} {
    %c0 = arith.constant 0 : index
    %c0_0 = arith.constant 0 : index
    %c0_1 = arith.constant 0 : index
    %0 = vector.load %arg3[%c0, %c0_0, %c0_1] : memref<2x8x32xf32, #tpu.memory_space<vmem>>, vector<2x8x32xf32>
    %c0_2 = arith.constant 0 : index
    %c0_3 = arith.constant 0 : index
    %c0_4 = arith.constant 0 : index
    %1 = vector.load %arg4[%c0_2, %c0_3, %c0_4] : memref<2x8x1xf32, #tpu.memory_space<vmem>>, vector<2x8x1xf32>
    %cst = arith.constant 0.000000e+00 : f32
    %2 = vector.broadcast %cst : f32 to vector<2x8x1xf32>
    %3 = arith.cmpf one, %1, %2 : vector<2x8x1xf32>
    %cst_5 = arith.constant -1.000000e+04 : f32
    %4 = vector.shape_cast %3 : vector<2x8x1xi1> to vector<2x8x1xi1>
    %5 = vector.broadcast %4 : vector<2x8x1xi1> to vector<2x8x32xi1>
    %6 = vector.broadcast %cst_5 : f32 to vector<2x8x32xf32>
    %7 = arith.select %5, %0, %6 : vector<2x8x32xi1>, vector<2x8x32xf32>
    %cst_6 = arith.constant dense<0xFF800000> : vector<2x32xf32>
    %8 = vector.multi_reduction <maximumf>, %7, %cst_6 [1] : vector<2x8x32xf32> to vector<2x32xf32>
    %c0_i32 = arith.constant 0 : i32
    %9 = arith.cmpi eq, %arg2, %c0_i32 : i32
    %10 = arith.extui %9 : i1 to i32
    %c0_i32_7 = arith.constant 0 : i32
    %11 = arith.cmpi ne, %10, %c0_i32_7 : i32
    scf.if %11 {
      %c0_10 = arith.constant 0 : index
      %c0_11 = arith.constant 0 : index
      %15 = vector.load %arg5[%c0_10, %c0_11] : memref<2x32xf32, #tpu.memory_space<vmem>>, vector<2x32xf32>
      tpu.vector_store %arg5[%c0_10, %c0_11], %8 {strides = array<i32>} : memref<2x32xf32, #tpu.memory_space<vmem>>, vector<2x32xf32>,
    } else {
    }
    %c0_i32_8 = arith.constant 0 : i32
    %12 = arith.cmpi sgt, %arg2, %c0_i32_8 : i32
    %13 = arith.extui %12 : i1 to i32
    %c0_i32_9 = arith.constant 0 : i32
    %14 = arith.cmpi ne, %13, %c0_i32_9 : i32
    scf.if %14 {
      %c0_10 = arith.constant 0 : index
      %c0_11 = arith.constant 0 : index
      %15 = vector.load %arg5[%c0_10, %c0_11] : memref<2x32xf32, #tpu.memory_space<vmem>>, vector<2x32xf32>
      %16 = arith.maximumf %15, %8 : vector<2x32xf32>
      %c0_12 = arith.constant 0 : index
      %c0_13 = arith.constant 0 : index
      %17 = vector.load %arg5[%c0_12, %c0_13] : memref<2x32xf32, #tpu.memory_space<vmem>>, vector<2x32xf32>
      tpu.vector_store %arg5[%c0_12, %c0_13], %16 {strides = array<i32>} : memref<2x32xf32, #tpu.memory_space<vmem>>, vector<2x32xf32>,
    } else {
    }
    return
  }
  func.func @transform_0(%arg0: i32, %arg1: i32, %arg2: i32) -> (i32, i32, i32) {
    %c0_i32 = arith.constant 0 : i32
    return %arg0, %arg2, %arg1 : i32, i32, i32
  }
  func.func @transform_1(%arg0: i32, %arg1: i32, %arg2: i32) -> (i32, i32, i32) {
    %c0_i32 = arith.constant 0 : i32
    %c0_i32_0 = arith.constant 0 : i32
    return %arg0, %arg2, %c0_i32 : i32, i32, i32
  }
  func.func @transform_2(%arg0: i32, %arg1: i32, %arg2: i32) -> (i32, i32) {
    %c0_i32 = arith.constant 0 : i32
    return %arg0, %arg1 : i32, i32
  }
}

</mosaic_0001>

<llo_original>
// kernel: tpu_custom_call.1
$region0: #{tpu_custom_call.1}
  #allocation0 [shape = 'u32[]', space=smem, size = 0x4, offset = 0x4, fixed_abs, tag = 'smem constant byte address 0x4 - core index']
  #allocation1 [shape = 'u32[72,128]{1,0:T(1,128)}', space=vmem, size = 0x9000, scoped, tag = 'internal scratch']
  %s0 = inlined_call_operand.vmem [shape: f32[2,8,32], index: 0, kind: input, shape index: {}]
  %s1 = inlined_call_operand.vmem [shape: f32[2,8,1], index: 1, kind: input, shape index: {}]
  %s2 = inlined_call_operand.hbm [shape: f32[2,32], index: 2, kind: output, shape index: {}]
  %s3 = sld [smem:[#allocation0]]
  $region26: #{tpu_custom_call.1} parent=0
    _
  %s5 = ssub.s32 1, %s3
  %s6 = scalar_select 0, %s5, %s3
  $region1: #{tpu_custom_call.1} parent=0
    #allocation2 [shape = 'u8[1024]{0}', space=vmem, size = 0x400, scoped, tag = 'output window, operand 0, single buffered']
    #allocation3 [shape = 's32[1]{0}', space=sflag, size = 0x4, scoped, tag = 'scoped memory for tpu_custom_call.1']
    %7 = vsyncpa [#allocation3], 0
    // Predicated region
    $region2: #{tpu_custom_call.1} parent=1 // pred_check
      _
    $region3: #{tpu_custom_call.1} parent=1 // pred_check_branch
      %9 = sbr.rel (0) target = $region5
    $region4: #{tpu_custom_call.1} parent=1 // pred_region
      _
    $region5: #{tpu_custom_call.1} parent=1 // pred_fallthru
      _
    // Predicated region
    $region6: #{tpu_custom_call.1} parent=1 // pred_check
      _
    $region7: #{tpu_custom_call.1} parent=1 // pred_check_branch
      %11 = sbr.rel (0) target = $region9
    $region8: #{tpu_custom_call.1} parent=1 // pred_region
      _
    $region9: #{tpu_custom_call.1} parent=1 // pred_fallthru
      _
    %v12 = vld [vmem:[%s0] sm:$0xff]
    %v13 = vld [vmem:[%s0 + $0x8] sm:$0xff]
    %v14 = vld [vmem:[%s1] sm:$0xff]
    %v15 = vld [vmem:[%s1 + $0x8] sm:$0xff]
    %vm16 = vcmp.ne.f32.partialorder %v14, 0.0
    %vm17 = vcmp.ne.f32.partialorder %v15, 0.0
    %v18 = vsel %vm16, 1, 0
    %v19 = vsel %vm17, 1, 0
    %20 = vset.pattern.permute.xlu0 0
    %21 = vperm.xlu0 %20, %v18
    %v22 = vpop.permute.xlu0 %21
    %23 = vset.pattern.permute.xlu0 0
    %24 = vperm.xlu0 %23, %v19
    %v25 = vpop.permute.xlu0 %24
    %vm26 = vcmp.eq.s32.totalorder %v22, 1
    %vm27 = vcmp.eq.s32.totalorder %v25, 1
    %v28 = vsel %vm26, %v12, -10000.0
    %v29 = vsel %vm27, %v13, -10000.0
    %vm30 = vcmask 261120
    %v31 = vsel %vm30, %v28, -inf
    %v32 = vrot.slane %v31, 4
    %v33 = vmax.f32 %v31, %v32
    %v34 = vrot.slane %v33, 2
    %v35 = vmax.f32 %v33, %v34
    %v36 = vrot.slane %v35, 1
    %v37 = vmax.f32 %v35, %v36
    %v38 = vsel %vm30, %v29, -inf
    %v39 = vrot.slane %v38, 4
    %v40 = vmax.f32 %v38, %v39
    %v41 = vrot.slane %v40, 2
    %v42 = vmax.f32 %v40, %v41
    %v43 = vrot.slane %v42, 1
    %v44 = vmax.f32 %v42, %v43
    %p45 = scmp.eq.s32.totalorder 0, 0
    // Predicated region
    $region10: #{tpu_custom_call.1} parent=1 // pred_check
      %p46 = pneg %p45
    $region11: #{tpu_custom_call.1} parent=1 // pred_check_branch
      %48 = sbr.rel (%p46) target = $region13
    $region12: #{tpu_custom_call.1} parent=1 // pred_region
      %vm51 = vcmask 1041409
      %v52 = vsel %vm51, %v44, %v37
      %vm54 = vcmask 254976
      %55 = vst.msk [vmem:[#allocation2] sm:$0x3] %vm54, %v52
    $region13: #{tpu_custom_call.1} parent=1 // pred_fallthru
      _
    %p56 = scmp.gt.s32.totalorder 0, 0
    // Predicated region
    $region14: #{tpu_custom_call.1} parent=1 // pred_check
      %p57 = pneg %p56
    $region15: #{tpu_custom_call.1} parent=1 // pred_check_branch
      %59 = sbr.rel (%p57) target = $region17
    $region16: #{tpu_custom_call.1} parent=1 // pred_region
      %v60 = vld [vmem:[#allocation2] sm:$0x3]
      %vm63 = vcmask 1041409
      %v64 = vsel %vm63, %v44, %v37
      %v66 = vmax.f32 %v60, %v64
      %vm67 = vcmask 254976
      %68 = vst.msk [vmem:[#allocation2] sm:$0x3] %vm67, %v66
    $region17: #{tpu_custom_call.1} parent=1 // pred_fallthru
      _
    // Predicated region
    $region18: #{tpu_custom_call.1} parent=1 // pred_check
      _
    $region19: #{tpu_custom_call.1} parent=1 // pred_check_branch
      %70 = sbr.rel (0) target = $region21
    $region20: #{tpu_custom_call.1} parent=1 // pred_region
      %72 = vsyncadd [#allocation3], 0
      %s74 = sshll.u32 [#allocation2], 4
      %s75 = int_to_ptr.vmem [resolvable:$true] %s74
      %s76 = sshll.u32 %s2, 4
      %s77 = int_to_ptr.hbm [resolvable:$true] %s76
      %79 = dma.vmem_to_hbm [thread:$0]  %s75, 32, %s77, [#allocation3]
    $region21: #{tpu_custom_call.1} parent=1 // pred_fallthru
      _
    // Predicated region
    $region22: #{tpu_custom_call.1} parent=1 // pred_check
      _
    $region23: #{tpu_custom_call.1} parent=1 // pred_check_branch
      %81 = sbr.rel (0) target = $region25
    $region24: #{tpu_custom_call.1} parent=1 // pred_region
      %83 = dma.done [#allocation3], 32
    $region25: #{tpu_custom_call.1} parent=1 // pred_fallthru
      _
    %84 = vsyncpa [#allocation3], 1

</llo_original>
